<compile_context>
chip_gen: v6e
topology: v6e:2x2x1
jax: 0.10.0
libtpu: 0.0.40
codegen_flags: <defaults>
</compile_context>

<pallas_src>
import jax
import jax.numpy as jnp
from jax.experimental import pallas as pl
from jax.experimental.pallas import tpu as pltpu  # noqa: F401  (TPU backend)

LANE = 128


def head_kernel(x_ref, w_ref, b_ref, o_ref):
    # x_ref: (B, HW, C) bf16   w_ref: (C, NP) bf16   b_ref: (1, NP) f32
    # o_ref: (B, NP) f32
    x = x_ref[...].astype(jnp.float32)                    # (B, HW, C)
    # Global average pool as an f32 sublane-axis sum over HW (the 1/HW scale is
    # pre-folded into w_ref at init time).
    pooled = jnp.sum(x, axis=1)                           # (B, C) f32
    logits = jnp.dot(pooled.astype(w_ref.dtype), w_ref[...],
                     preferred_element_type=jnp.float32)  # (B, NP) on the MXU
    o_ref[...] = logits + b_ref[...]                      # bias broadcast over B


def precompute_head_params(fc_weight, fc_bias, hw):
    """One-time (module-init) prep of the fc parameters for the Pallas head.

    fc_weight: (NUM_CLASSES, C) f32    fc_bias: (NUM_CLASSES,) f32
    Returns (w_pad, b_pad):
      w_pad: (C, NP) bf16  — transposed, 1/HW pooling scale folded in, zero-padded
             to a lane-dense multiple of 128 classes.
      b_pad: (1, NP) f32   — zero-padded bias.
    """
    num_classes, c = fc_weight.shape
    n_pad = pl.cdiv(num_classes, LANE) * LANE
    w_t = (fc_weight.T / float(hw)).astype(jnp.float32)               # (C, NC)
    w_pad = (jnp.zeros((c, n_pad), jnp.float32)
             .at[:, :num_classes].set(w_t)
             .astype(jnp.bfloat16))
    b_pad = (jnp.zeros((1, n_pad), jnp.float32)
             .at[:, :num_classes].set(fc_bias.astype(jnp.float32)))
    return w_pad, b_pad


def classifier_head_padded(x_hwc, w_pad, b_pad):
    """Fused pool + Linear head.

    x_hwc: (B, HW, C) channels-last feature map (any float dtype; cast to bf16).
    w_pad, b_pad: from precompute_head_params (constant, pre-padded).
    Returns padded logits (B, NP) f32; lanes >= NUM_CLASSES are exactly 0.0 and
    must be masked (e.g. to -inf) before any fused softmax/argmax.
    """
    B, HW, C = x_hwc.shape
    n_pad = w_pad.shape[1]
    x_bf16 = x_hwc.astype(jnp.bfloat16)

    return pl.pallas_call(
        head_kernel,
        out_shape=jax.ShapeDtypeStruct((B, n_pad), jnp.float32),
        # Full-array blocks (tiny shapes), no grid.  Full-extent blocks satisfy
        # the (8,128) rule; C=512 and n_pad=128 are natively lane-aligned.
        in_specs=[
            pl.BlockSpec((B, HW, C), lambda: (0, 0, 0)),
            pl.BlockSpec((C, n_pad), lambda: (0, 0)),
            pl.BlockSpec((1, n_pad), lambda: (0, 0)),
        ],
        out_specs=pl.BlockSpec((B, n_pad), lambda: (0, 0)),
    )(x_bf16, w_pad, b_pad)


if __name__ == "__main__":
    key = jax.random.PRNGKey(0)
    kx, kw, kb = jax.random.split(key, 3)

    # Shapes consistent with the module: resnet18's final feature map has
    # C = fc.in_features = 512 channels; tiny batch and spatial extent.
    B, C, H, W = 2, 512, 4, 4
    NUM_CLASSES = 10
    HW = H * W

    x_nchw = jax.random.normal(kx, (B, C, H, W), dtype=jnp.float32)
    fc_weight = 0.02 * jax.random.normal(kw, (NUM_CLASSES, C), dtype=jnp.float32)
    fc_bias = 0.02 * jax.random.normal(kb, (NUM_CLASSES,), dtype=jnp.float32)

    # --- Module init (once): constant, pre-padded, pre-scaled head params. ---
    w_pad, b_pad = precompute_head_params(fc_weight, fc_bias, HW)
    w_pad, b_pad = jax.block_until_ready((w_pad, b_pad))

    # The backbone should emit channels-last (B, HW, C) directly; there is no
    # backbone here, so convert the NCHW test input once, outside the head.
    x_hwc = jnp.transpose(x_nchw.reshape(B, C, HW), (0, 2, 1))  # (B, HW, C)

    out_padded = classifier_head_padded(x_hwc, w_pad, b_pad)
    jax.block_until_ready(out_padded)

    # Pure-JAX reference (mean pool then Linear, f32) for correctness.
    ref = x_nchw.mean(axis=(2, 3)) @ fc_weight.T + fc_bias

    assert out_padded.shape == (B, LANE)
    # Padded lanes are exactly zero (zero weight columns + zero bias pad).
    assert jnp.all(out_padded[:, NUM_CLASSES:] == 0.0), "padded lanes not zero"
    out = out_padded[:, :NUM_CLASSES]  # slice only for the reference check
    # bf16 activations/weights -> looser tolerance than the pure-f32 version.
    assert jnp.allclose(out, ref, atol=2e-2, rtol=2e-2), "mismatch vs reference"

    print("KERNEL_OK")
</pallas_src>

<mosaic_0001>
module attributes {stable_mosaic.version = 11 : i64} {
  func.func @head_kernel(%arg0: memref<2x16x512xbf16, #tpu.memory_space<vmem>>, %arg1: memref<512x128xbf16, #tpu.memory_space<vmem>>, %arg2: memref<1x128xf32, #tpu.memory_space<vmem>>, %arg3: memref<2x128xf32, #tpu.memory_space<vmem>>) attributes {dimension_semantics = [], scalar_prefetch = 0 : i64, scratch_operands = 0 : i64, tpu.core_type = #tpu.core_type<tc>} {
    %c0 = arith.constant 0 : index
    %c0_0 = arith.constant 0 : index
    %c0_1 = arith.constant 0 : index
    %0 = vector.load %arg0[%c0, %c0_0, %c0_1] : memref<2x16x512xbf16, #tpu.memory_space<vmem>>, vector<2x16x512xbf16>
    %1 = arith.extf %0 : vector<2x16x512xbf16> to vector<2x16x512xf32>
    %cst = arith.constant dense<0.000000e+00> : vector<2x512xf32>
    %2 = vector.multi_reduction <add>, %1, %cst [1] : vector<2x16x512xf32> to vector<2x512xf32>
    %3 = arith.truncf %2 : vector<2x512xf32> to vector<2x512xbf16>
    %c0_2 = arith.constant 0 : index
    %c0_3 = arith.constant 0 : index
    %4 = vector.load %arg1[%c0_2, %c0_3] : memref<512x128xbf16, #tpu.memory_space<vmem>>, vector<512x128xbf16>
    %cst_4 = arith.constant dense<0.000000e+00> : vector<2x128xf32>
    %5 = tpu.matmul %3, %4, %cst_4 {dimension_numbers = #tpu.dot_dimension_numbers<[1], [0], [0], [1], [0, 0, 1, 1], [], []>} : vector<2x512xbf16>, vector<512x128xbf16>, vector<2x128xf32> -> vector<2x128xf32>
    %c0_5 = arith.constant 0 : index
    %c0_6 = arith.constant 0 : index
    %6 = vector.load %arg2[%c0_5, %c0_6] : memref<1x128xf32, #tpu.memory_space<vmem>>, vector<1x128xf32>
    %7 = vector.broadcast %6 : vector<1x128xf32> to vector<2x128xf32>
    %8 = arith.addf %5, %7 : vector<2x128xf32>
    %c0_7 = arith.constant 0 : index
    %c0_8 = arith.constant 0 : index
    %9 = vector.load %arg3[%c0_7, %c0_8] : memref<2x128xf32, #tpu.memory_space<vmem>>, vector<2x128xf32>
    tpu.vector_store %arg3[%c0_7, %c0_8], %8 {strides = array<i32>} : memref<2x128xf32, #tpu.memory_space<vmem>>, vector<2x128xf32>,
    return
  }
}

</mosaic_0001>

<llo_original>
// kernel: tpu_custom_call.1
$region0: #{tpu_custom_call.1}
  #allocation0 [shape = 'u32[]', space=smem, size = 0x4, offset = 0x4, fixed_abs, tag = 'smem constant byte address 0x4 - core index']
  #allocation1 [shape = 'u32[144,128]{1,0:T(1,128)}', space=vmem, size = 0x12000, scoped, tag = 'internal scratch']
  %s0 = inlined_call_operand.hbm [shape: bf16[2,16,512], index: 0, kind: input, shape index: {}]
  %s1 = inlined_call_operand.hbm [shape: bf16[512,128], index: 1, kind: input, shape index: {}]
  %s2 = inlined_call_operand.vmem [shape: f32[1,128], index: 2, kind: input, shape index: {}]
  %s3 = inlined_call_operand.hbm [shape: f32[2,128], index: 3, kind: output, shape index: {}]
  %s4 = sld [smem:[#allocation0]]
  $region30: #{tpu_custom_call.1} parent=0
    _
  %s6 = ssub.s32 1, %s4
  %s7 = scalar_select 0, %s6, %s4
  $region1: #{tpu_custom_call.1} parent=0
    #allocation2 [shape = 'u8[32768]{0}', space=vmem, size = 0x8000, scoped, tag = 'input window, operand 0, single buffered']
    #allocation3 [shape = 's32[1]{0}', space=sflag, size = 0x4, scoped, tag = 'scoped memory for tpu_custom_call.1']
    #allocation4 [shape = 's32[1]{0}', space=sflag, size = 0x4, scoped, tag = 'scoped memory for tpu_custom_call.1']
    #allocation5 [shape = 'u8[131072]{0}', space=vmem, size = 0x20000, scoped, tag = 'input window, operand 1, single buffered']
    #allocation6 [shape = 's32[1]{0}', space=sflag, size = 0x4, scoped, tag = 'scoped memory for tpu_custom_call.1']
    #allocation7 [shape = 'u8[1024]{0}', space=vmem, size = 0x400, scoped, tag = 'output window, operand 0, single buffered']
    %8 = vsyncpa [#allocation3], 0
    %9 = vsyncpa [#allocation6], 0
    %10 = vsyncpa [#allocation4], 0
    // Predicated region
    $region2: #{tpu_custom_call.1} parent=1 // pred_check
      _
    $region3: #{tpu_custom_call.1} parent=1 // pred_check_branch
      %12 = sbr.rel (0) target = $region5
    $region4: #{tpu_custom_call.1} parent=1 // pred_region
      %s14 = ssub.s32 1024, 1024
      %15 = vsyncadd [#allocation3], %s14
      %s16 = sshll.u32 [#allocation2], 4
      %s17 = int_to_ptr.vmem [resolvable:$true] %s16
      %22 = dma.hbm_to_vmem [thread:$0]  %s0, 1024, %s17, [#allocation3], 256, 256, 16
    $region5: #{tpu_custom_call.1} parent=1 // pred_fallthru
      _
    // Predicated region
    $region6: #{tpu_custom_call.1} parent=1 // pred_check
      _
    $region7: #{tpu_custom_call.1} parent=1 // pred_check_branch
      %24 = sbr.rel (0) target = $region9
    $region8: #{tpu_custom_call.1} parent=1 // pred_region
      %s26 = ssub.s32 4096, 4096
      %27 = vsyncadd [#allocation6], %s26
      %s28 = sshll.u32 [#allocation5], 4
      %s29 = int_to_ptr.vmem [resolvable:$true] %s28
      %34 = dma.hbm_to_vmem [thread:$0]  %s1, 4096, %s29, [#allocation6], 64, 64, 4
    $region9: #{tpu_custom_call.1} parent=1 // pred_fallthru
      _
    // Predicated region
    $region10: #{tpu_custom_call.1} parent=1 // pred_check
      _
    $region11: #{tpu_custom_call.1} parent=1 // pred_check_branch
      %36 = sbr.rel (0) target = $region13
    $region12: #{tpu_custom_call.1} parent=1 // pred_region
      _
    $region13: #{tpu_custom_call.1} parent=1 // pred_fallthru
      _
    // Predicated region
    $region14: #{tpu_custom_call.1} parent=1 // pred_check
      _
    $region15: #{tpu_custom_call.1} parent=1 // pred_check_branch
      %38 = sbr.rel (0) target = $region17
    $region16: #{tpu_custom_call.1} parent=1 // pred_region
      %39 = dma.done [#allocation3], 1024
    $region17: #{tpu_custom_call.1} parent=1 // pred_fallthru
      _
    // Predicated region
    $region18: #{tpu_custom_call.1} parent=1 // pred_check
      _
    $region19: #{tpu_custom_call.1} parent=1 // pred_check_branch
      %41 = sbr.rel (0) target = $region21
    $region20: #{tpu_custom_call.1} parent=1 // pred_region
      %42 = dma.done [#allocation6], 4096
    $region21: #{tpu_custom_call.1} parent=1 // pred_fallthru
      _
    %v44 = vld [vmem:[#allocation2] sm:$0xff]
    %v45 = vld [vmem:[#allocation2 + $0x8] sm:$0xff]
    %v46 = vld [vmem:[#allocation2 + $0x10] sm:$0xff]
    %v47 = vld [vmem:[#allocation2 + $0x18] sm:$0xff]
    %v48 = vld [vmem:[#allocation2 + $0x20] sm:$0xff]
    %v49 = vld [vmem:[#allocation2 + $0x28] sm:$0xff]
    %v50 = vld [vmem:[#allocation2 + $0x30] sm:$0xff]
    %v51 = vld [vmem:[#allocation2 + $0x38] sm:$0xff]
    %v52 = vunpack.c.l.bf16 %v44
    %v53 = vunpack.c.h.bf16 %v44
    %v54 = vunpack.c.l.bf16 %v45
    %v55 = vunpack.c.h.bf16 %v45
    %v56 = vunpack.c.l.bf16 %v46
    %v57 = vunpack.c.h.bf16 %v46
    %v58 = vunpack.c.l.bf16 %v47
    %v59 = vunpack.c.h.bf16 %v47
    %v60 = vunpack.c.l.bf16 %v48
    %v61 = vunpack.c.h.bf16 %v48
    %v62 = vunpack.c.l.bf16 %v49
    %v63 = vunpack.c.h.bf16 %v49
    %v64 = vunpack.c.l.bf16 %v50
    %v65 = vunpack.c.h.bf16 %v50
    %v66 = vunpack.c.l.bf16 %v51
    %v67 = vunpack.c.h.bf16 %v51
    %v68 = vadd.f32 %v52, %v56
    %v69 = vrot.slane %v68, 4
    %v70 = vadd.f32 %v68, %v69
    %v71 = vrot.slane %v70, 2
    %v72 = vadd.f32 %v70, %v71
    %v73 = vrot.slane %v72, 1
    %v74 = vadd.f32 %v72, %v73
    %v75 = vadd.f32 %v53, %v57
    %v76 = vrot.slane %v75, 4
    %v77 = vadd.f32 %v75, %v76
    %v78 = vrot.slane %v77, 2
    %v79 = vadd.f32 %v77, %v78
    %v80 = vrot.slane %v79, 1
    %v81 = vadd.f32 %v79, %v80
    %v82 = vadd.f32 %v54, %v58
    %v83 = vrot.slane %v82, 4
    %v84 = vadd.f32 %v82, %v83
    %v85 = vrot.slane %v84, 2
    %v86 = vadd.f32 %v84, %v85
    %v87 = vrot.slane %v86, 1
    %v88 = vadd.f32 %v86, %v87
    %v89 = vadd.f32 %v55, %v59
    %v90 = vrot.slane %v89, 4
    %v91 = vadd.f32 %v89, %v90
    %v92 = vrot.slane %v91, 2
    %v93 = vadd.f32 %v91, %v92
    %v94 = vrot.slane %v93, 1
    %v95 = vadd.f32 %v93, %v94
    %v96 = vadd.f32 %v60, %v64
    %v97 = vrot.slane %v96, 4
    %v98 = vadd.f32 %v96, %v97
    %v99 = vrot.slane %v98, 2
    %v100 = vadd.f32 %v98, %v99
    %v101 = vrot.slane %v100, 1
    %v102 = vadd.f32 %v100, %v101
    %v103 = vadd.f32 %v61, %v65
    %v104 = vrot.slane %v103, 4
    %v105 = vadd.f32 %v103, %v104
    %v106 = vrot.slane %v105, 2
    %v107 = vadd.f32 %v105, %v106
    %v108 = vrot.slane %v107, 1
    %v109 = vadd.f32 %v107, %v108
    %v110 = vadd.f32 %v62, %v66
    %v111 = vrot.slane %v110, 4
    %v112 = vadd.f32 %v110, %v111
    %v113 = vrot.slane %v112, 2
    %v114 = vadd.f32 %v112, %v113
    %v115 = vrot.slane %v114, 1
    %v116 = vadd.f32 %v114, %v115
    %v117 = vadd.f32 %v63, %v67
    %v118 = vrot.slane %v117, 4
    %v119 = vadd.f32 %v117, %v118
    %v120 = vrot.slane %v119, 2
    %v121 = vadd.f32 %v119, %v120
    %v122 = vrot.slane %v121, 1
    %v123 = vadd.f32 %v121, %v122
    %v124 = vpack.c.bf16 %v74, %v74
    %v125 = vpack.c.bf16 %v81, %v81
    %v126 = vpack.c.bf16 %v88, %v88
    %v127 = vpack.c.bf16 %v95, %v95
    %v128 = vpack.c.bf16 %v102, %v102
    %v129 = vpack.c.bf16 %v109, %v109
    %v130 = vpack.c.bf16 %v116, %v116
    %v131 = vpack.c.bf16 %v123, %v123
    %v132 = vld [vmem:[#allocation5] sm:$0xf]
    %v133 = vld [vmem:[#allocation5 + $0x4] sm:$0xf]
    %v134 = vld [vmem:[#allocation5 + $0x8] sm:$0xf]
    %v135 = vld [vmem:[#allocation5 + $0xc] sm:$0xf]
    %v136 = vld [vmem:[#allocation5 + $0x10] sm:$0xf]
    %v137 = vld [vmem:[#allocation5 + $0x14] sm:$0xf]
    %v138 = vld [vmem:[#allocation5 + $0x18] sm:$0xf]
    %v139 = vld [vmem:[#allocation5 + $0x1c] sm:$0xf]
    %v140 = vld [vmem:[#allocation5 + $0x20] sm:$0xf]
    %v141 = vld [vmem:[#allocation5 + $0x24] sm:$0xf]
    %v142 = vld [vmem:[#allocation5 + $0x28] sm:$0xf]
    %v143 = vld [vmem:[#allocation5 + $0x2c] sm:$0xf]
    %v144 = vld [vmem:[#allocation5 + $0x30] sm:$0xf]
    %v145 = vld [vmem:[#allocation5 + $0x34] sm:$0xf]
    %v146 = vld [vmem:[#allocation5 + $0x38] sm:$0xf]
    %v147 = vld [vmem:[#allocation5 + $0x3c] sm:$0xf]
    %v148 = vld [vmem:[#allocation5 + $0x40] sm:$0xf]
    %v149 = vld [vmem:[#allocation5 + $0x44] sm:$0xf]
    %v150 = vld [vmem:[#allocation5 + $0x48] sm:$0xf]
    %v151 = vld [vmem:[#allocation5 + $0x4c] sm:$0xf]
    %v152 = vld [vmem:[#allocation5 + $0x50] sm:$0xf]
    %v153 = vld [vmem:[#allocation5 + $0x54] sm:$0xf]
    %v154 = vld [vmem:[#allocation5 + $0x58] sm:$0xf]
    %v155 = vld [vmem:[#allocation5 + $0x5c] sm:$0xf]
    %v156 = vld [vmem:[#allocation5 + $0x60] sm:$0xf]
    %v157 = vld [vmem:[#allocation5 + $0x64] sm:$0xf]
    %v158 = vld [vmem:[#allocation5 + $0x68] sm:$0xf]
    %v159 = vld [vmem:[#allocation5 + $0x6c] sm:$0xf]
    %v160 = vld [vmem:[#allocation5 + $0x70] sm:$0xf]
    %v161 = vld [vmem:[#allocation5 + $0x74] sm:$0xf]
    %v162 = vld [vmem:[#allocation5 + $0x78] sm:$0xf]
    %v163 = vld [vmem:[#allocation5 + $0x7c] sm:$0xf]
    %v164 = vld [vmem:[#allocation5 + $0x80] sm:$0xf]
    %v165 = vld [vmem:[#allocation5 + $0x84] sm:$0xf]
    %v166 = vld [vmem:[#allocation5 + $0x88] sm:$0xf]
    %v167 = vld [vmem:[#allocation5 + $0x8c] sm:$0xf]
    %v168 = vld [vmem:[#allocation5 + $0x90] sm:$0xf]
    %v169 = vld [vmem:[#allocation5 + $0x94] sm:$0xf]
    %v170 = vld [vmem:[#allocation5 + $0x98] sm:$0xf]
    %v171 = vld [vmem:[#allocation5 + $0x9c] sm:$0xf]
    %v172 = vld [vmem:[#allocation5 + $0xa0] sm:$0xf]
    %v173 = vld [vmem:[#allocation5 + $0xa4] sm:$0xf]
    %v174 = vld [vmem:[#allocation5 + $0xa8] sm:$0xf]
    %v175 = vld [vmem:[#allocation5 + $0xac] sm:$0xf]
    %v176 = vld [vmem:[#allocation5 + $0xb0] sm:$0xf]
    %v177 = vld [vmem:[#allocation5 + $0xb4] sm:$0xf]
    %v178 = vld [vmem:[#allocation5 + $0xb8] sm:$0xf]
    %v179 = vld [vmem:[#allocation5 + $0xbc] sm:$0xf]
    %v180 = vld [vmem:[#allocation5 + $0xc0] sm:$0xf]
    %v181 = vld [vmem:[#allocation5 + $0xc4] sm:$0xf]
    %v182 = vld [vmem:[#allocation5 + $0xc8] sm:$0xf]
    %v183 = vld [vmem:[#allocation5 + $0xcc] sm:$0xf]
    %v184 = vld [vmem:[#allocation5 + $0xd0] sm:$0xf]
    %v185 = vld [vmem:[#allocation5 + $0xd4] sm:$0xf]
    %v186 = vld [vmem:[#allocation5 + $0xd8] sm:$0xf]
    %v187 = vld [vmem:[#allocation5 + $0xdc] sm:$0xf]
    %v188 = vld [vmem:[#allocation5 + $0xe0] sm:$0xf]
    %v189 = vld [vmem:[#allocation5 + $0xe4] sm:$0xf]
    %v190 = vld [vmem:[#allocation5 + $0xe8] sm:$0xf]
    %v191 = vld [vmem:[#allocation5 + $0xec] sm:$0xf]
    %v192 = vld [vmem:[#allocation5 + $0xf0] sm:$0xf]
    %v193 = vld [vmem:[#allocation5 + $0xf4] sm:$0xf]
    %v194 = vld [vmem:[#allocation5 + $0xf8] sm:$0xf]
    %v195 = vld [vmem:[#allocation5 + $0xfc] sm:$0xf]
    %v196 = vld [vmem:[%s2] sm:$0x1]
    %v198 = vlaneseq
    %v199 = vshrl.u32 %v198, 7
    %v200 = vsub.s32 0, %v199
    %v201 = vrot.slane %v196, %v200
    %v211 = vunpack.c.l.b16 %v124
    %v212 = vunpack.c.l.b16 %v125
    %v213 = vunpack.c.l.b16 %v126
    %v214 = vunpack.c.l.b16 %v127
    %v215 = vunpack.c.l.b16 %v128
    %v216 = vunpack.c.l.b16 %v129
    %v217 = vunpack.c.l.b16 %v130
    %v218 = vunpack.c.l.b16 %v131
    %vm219 = vcmask 1041409
    %v220 = vsel %vm219, %v215, %v211
    %v221 = vsel %vm219, %v216, %v212
    %v222 = vsel %vm219, %v217, %v213
    %v223 = vsel %vm219, %v218, %v214
    %v224 = vpack.c.b16 %v220, %v220
    %v225 = vpack.c.b16 %v221, %v221
    %v226 = vpack.c.b16 %v222, %v222
    %v227 = vpack.c.b16 %v223, %v223
    %v296 = vunpack.c.l.b16 %v132
    %v297 = vunpack.c.l.b16 %v133
    %v298 = vunpack.c.l.b16 %v134
    %v299 = vunpack.c.l.b16 %v135
    %v300 = vunpack.c.l.b16 %v136
    %v301 = vunpack.c.l.b16 %v137
    %v302 = vunpack.c.l.b16 %v138
    %v303 = vunpack.c.l.b16 %v139
    %v304 = vunpack.c.l.b16 %v140
    %v305 = vunpack.c.l.b16 %v141
    %v306 = vunpack.c.l.b16 %v142
    %v307 = vunpack.c.l.b16 %v143
    %v308 = vunpack.c.l.b16 %v144
    %v309 = vunpack.c.l.b16 %v145
    %v310 = vunpack.c.l.b16 %v146
    %v311 = vunpack.c.l.b16 %v147
    %v312 = vunpack.c.l.b16 %v148
    %v313 = vunpack.c.l.b16 %v149
    %v314 = vunpack.c.l.b16 %v150
    %v315 = vunpack.c.l.b16 %v151
    %v316 = vunpack.c.l.b16 %v152
    %v317 = vunpack.c.l.b16 %v153
    %v318 = vunpack.c.l.b16 %v154
    %v319 = vunpack.c.l.b16 %v155
    %v320 = vunpack.c.l.b16 %v156
    %v321 = vunpack.c.l.b16 %v157
    %v322 = vunpack.c.l.b16 %v158
    %v323 = vunpack.c.l.b16 %v159
    %v324 = vunpack.c.l.b16 %v160
    %v325 = vunpack.c.l.b16 %v161
    %v326 = vunpack.c.l.b16 %v162
    %v327 = vunpack.c.l.b16 %v163
    %v328 = vunpack.c.l.b16 %v164
    %v329 = vunpack.c.l.b16 %v165
    %v330 = vunpack.c.l.b16 %v166
    %v331 = vunpack.c.l.b16 %v167
    %v332 = vunpack.c.l.b16 %v168
    %v333 = vunpack.c.l.b16 %v169
    %v334 = vunpack.c.l.b16 %v170
    %v335 = vunpack.c.l.b16 %v171
    %v336 = vunpack.c.l.b16 %v172
    %v337 = vunpack.c.l.b16 %v173
    %v338 = vunpack.c.l.b16 %v174
    %v339 = vunpack.c.l.b16 %v175
    %v340 = vunpack.c.l.b16 %v176
    %v341 = vunpack.c.l.b16 %v177
    %v342 = vunpack.c.l.b16 %v178
    %v343 = vunpack.c.l.b16 %v179
    %v344 = vunpack.c.l.b16 %v180
    %v345 = vunpack.c.l.b16 %v181
    %v346 = vunpack.c.l.b16 %v182
    %v347 = vunpack.c.l.b16 %v183
    %v348 = vunpack.c.l.b16 %v184
    %v349 = vunpack.c.l.b16 %v185
    %v350 = vunpack.c.l.b16 %v186
    %v351 = vunpack.c.l.b16 %v187
    %v352 = vunpack.c.l.b16 %v188
    %v353 = vunpack.c.l.b16 %v189
    %v354 = vunpack.c.l.b16 %v190
    %v355 = vunpack.c.l.b16 %v191
    %v356 = vunpack.c.l.b16 %v192
    %v357 = vunpack.c.l.b16 %v193
    %v358 = vunpack.c.l.b16 %v194
    %v359 = vunpack.c.l.b16 %v195
    %v360 = vpack.c.b16 %v297, %v296
    %v361 = vpack.c.b16 %v299, %v298
    %v362 = vpack.c.b16 %v301, %v300
    %v363 = vpack.c.b16 %v303, %v302
    %v364 = vpack.c.b16 %v305, %v304
    %v365 = vpack.c.b16 %v307, %v306
    %v366 = vpack.c.b16 %v309, %v308
    %v367 = vpack.c.b16 %v311, %v310
    %v368 = vpack.c.b16 %v313, %v312
    %v369 = vpack.c.b16 %v315, %v314
    %v370 = vpack.c.b16 %v317, %v316
    %v371 = vpack.c.b16 %v319, %v318
    %v372 = vpack.c.b16 %v321, %v320
    %v373 = vpack.c.b16 %v323, %v322
    %v374 = vpack.c.b16 %v325, %v324
    %v375 = vpack.c.b16 %v327, %v326
    %v376 = vpack.c.b16 %v329, %v328
    %v377 = vpack.c.b16 %v331, %v330
    %v378 = vpack.c.b16 %v333, %v332
    %v379 = vpack.c.b16 %v335, %v334
    %v380 = vpack.c.b16 %v337, %v336
    %v381 = vpack.c.b16 %v339, %v338
    %v382 = vpack.c.b16 %v341, %v340
    %v383 = vpack.c.b16 %v343, %v342
    %v384 = vpack.c.b16 %v345, %v344
    %v385 = vpack.c.b16 %v347, %v346
    %v386 = vpack.c.b16 %v349, %v348
    %v387 = vpack.c.b16 %v351, %v350
    %v388 = vpack.c.b16 %v353, %v352
    %v389 = vpack.c.b16 %v355, %v354
    %v390 = vpack.c.b16 %v357, %v356
    %v391 = vpack.c.b16 %v359, %v358
    %424 = vmatprep.subr.bf16.mxu0 0
    %425 = vmatpush1.bf16.msra.mxu0 %v367
    %426 = vmatprep.subr.bf16.mxu0 0
    %427 = vmatpush1.bf16.msra.mxu0 %v366
    %428 = vmatprep.subr.bf16.mxu0 0
    %429 = vmatpush1.bf16.msra.mxu0 %v365
    %430 = vmatprep.subr.bf16.mxu0 0
    %431 = vmatpush1.bf16.msra.mxu0 %v364
    %432 = vmatprep.subr.bf16.mxu0 0
    %433 = vmatpush1.bf16.msra.mxu0 %v363
    %434 = vmatprep.subr.bf16.mxu0 0
    %435 = vmatpush1.bf16.msra.mxu0 %v362
    %436 = vmatprep.subr.bf16.mxu0 0
    %437 = vmatpush1.bf16.msra.mxu0 %v361
    %438 = vmatprep.subr.bf16.mxu0 0
    %439 = vmatpush1.bf16.msra.mxu0 %v360
    %440 = vmatprep.subr.bf16.mxu0 0
    %441 = vmatpush2.bf16.msra.mxu0 %v375
    %442 = vmatprep.subr.bf16.mxu0 0
    %443 = vmatpush2.bf16.msra.mxu0 %v374
    %444 = vmatprep.subr.bf16.mxu0 0
    %445 = vmatpush2.bf16.msra.mxu0 %v373
    %446 = vmatprep.subr.bf16.mxu0 0
    %447 = vmatpush2.bf16.msra.mxu0 %v372
    %448 = vmatprep.subr.bf16.mxu0 0
    %449 = vmatpush2.bf16.msra.mxu0 %v371
    %450 = vmatprep.subr.bf16.mxu0 0
    %451 = vmatpush2.bf16.msra.mxu0 %v370
    %452 = vmatprep.subr.bf16.mxu0 0
    %453 = vmatpush2.bf16.msra.mxu0 %v369
    %454 = vmatprep.subr.bf16.mxu0 0
    %455 = vmatpush2.bf16.msra.mxu0 %v368
    %456 = vmatprep.mubr.bf16.mxu0 %v225
    %457 = vmatmul.mubr.bf16.gmra.mxu0 %v224
    %v458 = vpop.f32.mrf.mxu0
    %v459 = vadd.f32 %v201, %v458
    %v460 = vpop.f32.mrf.mxu0
    %v461 = vpop.f32.mrf.mxu0
    %v462 = vpop.f32.mrf.mxu0
    %463 = vdwg.mxu0
    %464 = vmatprep.subr.bf16.mxu0 0
    %465 = vmatpush1.bf16.msra.mxu0 %v383
    %466 = vmatprep.subr.bf16.mxu0 0
    %467 = vmatpush1.bf16.msra.mxu0 %v382
    %468 = vmatprep.subr.bf16.mxu0 0
    %469 = vmatpush1.bf16.msra.mxu0 %v381
    %470 = vmatprep.subr.bf16.mxu0 0
    %471 = vmatpush1.bf16.msra.mxu0 %v380
    %472 = vmatprep.subr.bf16.mxu0 0
    %473 = vmatpush1.bf16.msra.mxu0 %v379
    %474 = vmatprep.subr.bf16.mxu0 0
    %475 = vmatpush1.bf16.msra.mxu0 %v378
    %476 = vmatprep.subr.bf16.mxu0 0
    %477 = vmatpush1.bf16.msra.mxu0 %v377
    %478 = vmatprep.subr.bf16.mxu0 0
    %479 = vmatpush1.bf16.msra.mxu0 %v376
    %480 = vmatprep.subr.bf16.mxu0 0
    %481 = vmatpush2.bf16.msra.mxu0 %v391
    %482 = vmatprep.subr.bf16.mxu0 0
    %483 = vmatpush2.bf16.msra.mxu0 %v390
    %484 = vmatprep.subr.bf16.mxu0 0
    %485 = vmatpush2.bf16.msra.mxu0 %v389
    %486 = vmatprep.subr.bf16.mxu0 0
    %487 = vmatpush2.bf16.msra.mxu0 %v388
    %488 = vmatprep.subr.bf16.mxu0 0
    %489 = vmatpush2.bf16.msra.mxu0 %v387
    %490 = vmatprep.subr.bf16.mxu0 0
    %491 = vmatpush2.bf16.msra.mxu0 %v386
    %492 = vmatprep.subr.bf16.mxu0 0
    %493 = vmatpush2.bf16.msra.mxu0 %v385
    %494 = vmatprep.subr.bf16.mxu0 0
    %495 = vmatpush2.bf16.msra.mxu0 %v384
    %496 = vmatprep.mubr.bf16.mxu0 %v227
    %497 = vmatmul.mubr.bf16.gmra.mxu0 %v226
    %v498 = vpop.f32.mrf.mxu0
    %v499 = vadd.f32 %v459, %v498
    %v500 = vpop.f32.mrf.mxu0
    %v501 = vpop.f32.mrf.mxu0
    %v502 = vpop.f32.mrf.mxu0
    %503 = vdwg.mxu0
    %504 = vst [vmem:[#allocation7] sm:$0x3] %v499
    // Predicated region
    $region22: #{tpu_custom_call.1} parent=1 // pred_check
      _
    $region23: #{tpu_custom_call.1} parent=1 // pred_check_branch
      %506 = sbr.rel (0) target = $region25
    $region24: #{tpu_custom_call.1} parent=1 // pred_region
      %s508 = ssub.s32 32, 32
      %509 = vsyncadd [#allocation4], %s508
      %s511 = sshll.u32 [#allocation7], 4
      %s512 = int_to_ptr.vmem [resolvable:$true] %s511
      %514 = dma.vmem_to_hbm [thread:$0]  %s512, 32, %s3, [#allocation4]
    $region25: #{tpu_custom_call.1} parent=1 // pred_fallthru
      _
    // Predicated region
    $region26: #{tpu_custom_call.1} parent=1 // pred_check
      _
    $region27: #{tpu_custom_call.1} parent=1 // pred_check_branch
      %516 = sbr.rel (0) target = $region29
    $region28: #{tpu_custom_call.1} parent=1 // pred_region
      %517 = dma.done [#allocation4], 32
    $region29: #{tpu_custom_call.1} parent=1 // pred_fallthru
      _
    %518 = vsyncpa [#allocation3], 1
    %519 = vsyncpa [#allocation6], 1
    %520 = vsyncpa [#allocation4], 1

</llo_original>
